<compile_context>
chip_gen: v7x
topology: tpu7x:2x2x1
jax: 0.10.0
libtpu: 0.0.40
codegen_flags: <defaults>
</compile_context>

<pallas_src>
import functools

import jax
import jax.numpy as jnp
import numpy as np
from jax import lax
from jax.experimental import pallas as pl
from jax.experimental.pallas import tpu as pltpu


_VMEM_LIMIT = 32 * 1024 * 1024   # safe on v5e/v6e (128 MiB phys) and v7x (64 MiB)


def _silu(z):
    # SiLU(z) = z * sigmoid(z).  pl.reciprocal(..., approx=True) would move the
    # divide onto the EUP, but tightens against the 1e-3 check -> exact here.
    return z * pl.reciprocal(1.0 + jnp.exp(-z), approx=False)


# ----------------------------------------------------------------------------
# Kernel 1: cv1 = fused 1x1 conv (folded BN) + SiLU
#   NCHW input tile (1, C1, T)  ->  channels-last output tile (1, T, c_)
#   (the NCHW -> tokens-major transpose is folded into the dot_general)
# ----------------------------------------------------------------------------
def _cv1_kernel(w_ref, b_ref, x_ref, o_ref):
    # w_ref: (C1, c_)   b_ref: (1, c_)   x_ref: (1, C1, T)   o_ref: (1, T, c_)
    x = x_ref[0].astype(w_ref.dtype)                          # (C1, T)
    z = lax.dot_general(x, w_ref[...],                        # lhs-transposed matmul
                        dimension_numbers=(((0,), (0,)), ((), ())),
                        preferred_element_type=jnp.float32)   # (T, c_)
    z = z + b_ref[...]
    o_ref[0] = _silu(z).astype(o_ref.dtype)


# ----------------------------------------------------------------------------
# Kernel 2: fused SPP max-pools (5/9/13, stride 1, -inf pad) + cv2 + SiLU
#   channels-last y1 chunk in, NCHW output out, channel-chunk reduction axis.
# ----------------------------------------------------------------------------
def _pool5_valid(a):
    """5-wide stride-1 'valid' max pool over the two leading (spatial) axes.

    a: (P, Q, C) channels-last -> channels stay in lanes, every jnp.maximum is
    a full-width VPU op, shifts are sublane / major-dim selects.
    """
    p, q = a.shape[0], a.shape[1]
    r = a[:, 0:q - 4, :]
    for e in range(1, 5):
        r = jnp.maximum(r, a[:, e:e + q - 4, :])
    out = r[0:p - 4, :, :]
    for d in range(1, 5):
        out = jnp.maximum(out, r[d:d + p - 4, :, :])
    return out


def _pool_cv2_kernel(w2_ref, b2_ref, y1_ref, o_ref, pad_ref, acc_ref, *, H, W):
    # w2_ref : (4, ct, c2)  branch-major cv2 weight chunk (BN folded)
    # b2_ref : (1, c2)
    # y1_ref : (1, H, W, ct) channels-last y1 chunk
    # o_ref  : (1, c2, H*W)  final output (NCHW layout), written on last chunk
    # pad_ref: VMEM (H+12, W+12, ct) f32  (-inf framed pooling slab)
    # acc_ref: VMEM (H*W, c2) f32         accumulator over channel chunks
    cc = pl.program_id(1)

    @pl.when(cc == 0)
    def _():
        acc_ref[...] = jnp.zeros_like(acc_ref)

    # Build the -inf framed slab in VMEM (no HBM pad pass). Frame 6 covers k=13.
    a0 = y1_ref[0].astype(jnp.float32)                       # (H, W, ct)
    pad_ref[...] = jnp.full(pad_ref.shape, -jnp.inf, jnp.float32)
    pad_ref[6:6 + H, 6:6 + W, :] = a0
    a1 = _pool5_valid(pad_ref[...])                          # k=5          (H+8, W+8, ct)
    a2 = _pool5_valid(a1)                                    # k=9  (5∘5)   (H+4, W+4, ct)
    a3 = _pool5_valid(a2)                                    # k=13 (5∘5∘5) (H,   W,   ct)

    hw = H * W
    branches = (
        a0,                                                  # identity branch, straight from VMEM
        a1[4:4 + H, 4:4 + W, :],
        a2[2:2 + H, 2:2 + W, :],
        a3,
    )

    # cv2 as a 4-branch accumulation: the channel concat never hits HBM.
    acc = acc_ref[...]
    wd = w2_ref.dtype
    for j in range(4):
        acc = acc + lax.dot_general(
            branches[j].reshape(hw, -1).astype(wd), w2_ref[j],
            dimension_numbers=(((1,), (0,)), ((), ())),
            preferred_element_type=jnp.float32)              # (hw, c2)
    acc_ref[...] = acc

    @pl.when(cc == pl.num_programs(1) - 1)
    def _():
        z = acc_ref[...] + b2_ref[...]
        # One in-kernel transpose at finalize -> output is NCHW directly.
        o_ref[0] = jnp.transpose(_silu(z), (1, 0)).astype(o_ref.dtype)


# ----------------------------------------------------------------------------
# SPP forward (Pallas)
# ----------------------------------------------------------------------------
def _fold_bn(w, gamma, beta, mean, var, eps=1e-5):
    s = gamma / jnp.sqrt(var + eps)
    return w * s[:, None], beta - mean * s


def _pick_tile(total, cin, cout, itemsize=4, budget_bytes=8 * 1024 * 1024):
    """Largest lane-dense (multiple-of-128) token tile that fits a VMEM budget
    (double-buffered input + output tiles)."""
    if total % 128 != 0:
        return total                      # whole-axis block (legal: equals full dim)
    tile = 128
    for cand in (256, 512, 1024, 2048, 4096):
        if total % cand == 0 and 2 * itemsize * cand * (cin + cout) <= budget_bytes:
            tile = cand
    return tile


def spp_forward(x, params, compute_dtype=jnp.float32):
    """Pallas SPP forward.  x: (N, C1, H, W) float32.

    compute_dtype=jnp.bfloat16 enables bf16 MXU operands (v6e/v7x win);
    accumulation stays f32.  Default f32 keeps the 1e-3 check tight.
    """
    n, c1, h, w = x.shape
    hw = h * w

    w1f, b1f = _fold_bn(*params["cv1"])          # (c_, C1), (c_,)
    w2f, b2f = _fold_bn(*params["cv2"])          # (c2, 4*c_), (c2,)
    c_ = w1f.shape[0]
    c2 = w2f.shape[0]

    # ---- cv1: 1x1 conv + BN + SiLU; NCHW in, channels-last (tokens, c_) out ----
    w1t = w1f.T.astype(compute_dtype)            # (C1, c_)
    b1 = b1f.reshape(1, c_).astype(jnp.float32)
    x3 = x.reshape(n, c1, hw)                    # free reshape (NCHW is contiguous)

    thw = _pick_tile(hw, c1, c_, itemsize=jnp.dtype(compute_dtype).itemsize)
    y1 = pl.pallas_call(
        _cv1_kernel,
        out_shape=jax.ShapeDtypeStruct((n, hw, c_), x.dtype),
        grid_spec=pltpu.PrefetchScalarGridSpec(
            num_scalar_prefetch=0,
            grid=(n, hw // thw),
            in_specs=[
                pl.BlockSpec((c1, c_), lambda b, t: (0, 0)),        # weight (resident)
                pl.BlockSpec((1, c_), lambda b, t: (0, 0)),         # bias
                pl.BlockSpec((1, c1, thw), lambda b, t: (b, 0, t)),  # activations
            ],
            out_specs=pl.BlockSpec((1, thw, c_), lambda b, t: (b, t, 0)),
        ),
        compiler_params=pltpu.CompilerParams(
            dimension_semantics=("parallel", "parallel"),
            vmem_limit_bytes=_VMEM_LIMIT),
    )(w1t, b1, x3)

    # ---- fused SPP pooling + cv2 (1x1 conv + BN + SiLU); NCHW out ----
    # Branch-major cv2 weight: w2r[j] = W2.T rows for branch j (c_, c2).
    w2r = w2f.T.reshape(4, c_, c2).astype(compute_dtype)
    b2 = b2f.reshape(1, c2).astype(jnp.float32)
    y1_4d = y1.reshape(n, h, w, c_)                          # free reshape

    ct = 128 if c_ % 128 == 0 else c_                        # channel chunk (reduction axis)
    n_cc = c_ // ct
    kernel = functools.partial(_pool_cv2_kernel, H=h, W=w)
    out = pl.pallas_call(
        kernel,
        out_shape=jax.ShapeDtypeStruct((n, c2, hw), x.dtype),
        grid_spec=pltpu.PrefetchScalarGridSpec(
            num_scalar_prefetch=0,
            grid=(n, n_cc),
            in_specs=[
                pl.BlockSpec((4, ct, c2), lambda b, cc: (0, cc, 0)),     # cv2 weight chunk
                pl.BlockSpec((1, c2), lambda b, cc: (0, 0)),             # cv2 bias
                pl.BlockSpec((1, h, w, ct), lambda b, cc: (b, 0, 0, cc)),  # y1 chunk
            ],
            out_specs=pl.BlockSpec((1, c2, hw), lambda b, cc: (b, 0, 0)),
            scratch_shapes=[
                pltpu.VMEM((h + 12, w + 12, ct), jnp.float32),   # -inf framed slab
                pltpu.VMEM((hw, c2), jnp.float32),               # cv2 accumulator
            ],
        ),
        compiler_params=pltpu.CompilerParams(
            dimension_semantics=("parallel", "arbitrary"),
            vmem_limit_bytes=_VMEM_LIMIT),
    )(w2r, b2, y1_4d)

    return out.reshape(n, c2, h, w)


# ----------------------------------------------------------------------------
# Pure-JAX reference (eval-mode BN), for correctness checking
# ----------------------------------------------------------------------------
def _ref_conv_bn_silu(x, w, gamma, beta, mean, var, eps=1e-5):
    y = jnp.einsum("oc,nchw->nohw", w, x, precision=lax.Precision.HIGHEST)
    s = gamma / jnp.sqrt(var + eps)
    y = y * s[None, :, None, None] + (beta - mean * s)[None, :, None, None]
    return jax.nn.silu(y)


def _ref_maxpool(x, k):
    p = k // 2
    xp = jnp.pad(x, ((0, 0), (0, 0), (p, p), (p, p)), constant_values=-jnp.inf)
    return lax.reduce_window(xp, -jnp.inf, lax.max,
                             (1, 1, k, k), (1, 1, 1, 1), "VALID")


def spp_reference(x, params):
    w1, g1, be1, m1, v1 = params["cv1"]
    w2, g2, be2, m2, v2 = params["cv2"]
    y1 = _ref_conv_bn_silu(x, w1, g1, be1, m1, v1)
    cat = jnp.concatenate(
        [y1, _ref_maxpool(y1, 5), _ref_maxpool(y1, 9), _ref_maxpool(y1, 13)],
        axis=1)
    return _ref_conv_bn_silu(cat, w2, g2, be2, m2, v2)


# ----------------------------------------------------------------------------
if __name__ == "__main__":
    key = jax.random.PRNGKey(0)
    ks = jax.random.split(key, 12)

    N, C1, C2, H, W = 2, 16, 16, 16, 16   # SPP(c1=16, c2=16), k=(5, 9, 13)
    c_ = C1 // 2

    x = jax.random.normal(ks[0], (N, C1, H, W), dtype=jnp.float32)

    params = {
        "cv1": (
            jax.random.normal(ks[1], (c_, C1), dtype=jnp.float32) * 0.5,   # conv w
            jax.random.uniform(ks[2], (c_,), minval=0.5, maxval=1.5),      # bn gamma
            jax.random.normal(ks[3], (c_,), dtype=jnp.float32) * 0.1,      # bn beta
            jax.random.normal(ks[4], (c_,), dtype=jnp.float32) * 0.1,      # bn mean
            jax.random.uniform(ks[5], (c_,), minval=0.5, maxval=1.5),      # bn var
        ),
        "cv2": (
            jax.random.normal(ks[6], (C2, 4 * c_), dtype=jnp.float32) * 0.5,
            jax.random.uniform(ks[7], (C2,), minval=0.5, maxval=1.5),
            jax.random.normal(ks[8], (C2,), dtype=jnp.float32) * 0.1,
            jax.random.normal(ks[9], (C2,), dtype=jnp.float32) * 0.1,
            jax.random.uniform(ks[10], (C2,), minval=0.5, maxval=1.5),
        ),
    }

    out = jax.block_until_ready(spp_forward(x, params))
    ref = jax.block_until_ready(spp_reference(x, params))

    np.testing.assert_allclose(np.asarray(out), np.asarray(ref),
                               rtol=1e-3, atol=1e-3)
    print("KERNEL_OK")
</pallas_src>

<mosaic_0001>
module attributes {stable_mosaic.version = 11 : i64} {
  func.func @_cv1_kernel(%arg0: i32, %arg1: i32, %arg2: memref<16x8xf32, #tpu.memory_space<vmem>>, %arg3: memref<1x8xf32, #tpu.memory_space<vmem>>, %arg4: memref<1x16x256xf32, #tpu.memory_space<vmem>>, %arg5: memref<1x256x8xf32, #tpu.memory_space<vmem>>) attributes {dimension_semantics = [#tpu.dimension_semantics<parallel>, #tpu.dimension_semantics<parallel>], iteration_bounds = array<i64: 2, 1>, scalar_prefetch = 0 : i64, scratch_operands = 0 : i64, tpu.core_type = #tpu.core_type<tc>, window_params = [{pipeline_mode = #tpu.pipeline_mode<synchronous>, transform_indices = @transform_0, window_bounds = array<i64: 16, 8>}, {pipeline_mode = #tpu.pipeline_mode<synchronous>, transform_indices = @transform_1, window_bounds = array<i64: 1, 8>}, {transform_indices = @transform_2, window_bounds = array<i64: 1, 16, 256>}, {transform_indices = @transform_3, window_bounds = array<i64: 1, 256, 8>}]} {
    %c0 = arith.constant 0 : index
    %c0_0 = arith.constant 0 : index
    %c0_1 = arith.constant 0 : index
    %0 = vector.load %arg4[%c0, %c0_0, %c0_1] : memref<1x16x256xf32, #tpu.memory_space<vmem>>, vector<1x16x256xf32>
    %1 = vector.shape_cast %0 : vector<1x16x256xf32> to vector<16x256xf32>
    %c0_2 = arith.constant 0 : index
    %c0_3 = arith.constant 0 : index
    %2 = vector.load %arg2[%c0_2, %c0_3] : memref<16x8xf32, #tpu.memory_space<vmem>>, vector<16x8xf32>
    %cst = arith.constant dense<0.000000e+00> : vector<256x8xf32>
    %3 = tpu.matmul %1, %2, %cst {dimension_numbers = #tpu.dot_dimension_numbers<[0], [0], [1], [1], [0, 1, 1, 1], [], []>} : vector<16x256xf32>, vector<16x8xf32>, vector<256x8xf32> -> vector<256x8xf32>
    %c0_4 = arith.constant 0 : index
    %c0_5 = arith.constant 0 : index
    %4 = vector.load %arg3[%c0_4, %c0_5] : memref<1x8xf32, #tpu.memory_space<vmem>>, vector<1x8xf32>
    %5 = vector.broadcast %4 : vector<1x8xf32> to vector<256x8xf32>
    %6 = arith.addf %3, %5 : vector<256x8xf32>
    %cst_6 = arith.constant 0.000000e+00 : f32
    %7 = vector.broadcast %cst_6 : f32 to vector<256x8xf32>
    %8 = arith.subf %7, %6 : vector<256x8xf32>
    %9 = math.exp %8 : vector<256x8xf32>
    %cst_7 = arith.constant 1.000000e+00 : f32
    %10 = vector.broadcast %cst_7 : f32 to vector<256x8xf32>
    %11 = arith.addf %10, %9 : vector<256x8xf32>
    %12 = tpu.reciprocal %11 : vector<256x8xf32> -> vector<256x8xf32>
    %13 = arith.mulf %6, %12 : vector<256x8xf32>
    %c0_8 = arith.constant 0 : index
    %c0_9 = arith.constant 0 : index
    %c0_10 = arith.constant 0 : index
    %14 = vector.load %arg5[%c0_8, %c0_9, %c0_10] : memref<1x256x8xf32, #tpu.memory_space<vmem>>, vector<1x256x8xf32>
    %15 = vector.shape_cast %14 : vector<1x256x8xf32> to vector<256x8xf32>
    %16 = vector.shape_cast %13 : vector<256x8xf32> to vector<1x256x8xf32>
    tpu.vector_store %arg5[%c0_8, %c0_9, %c0_10], %16 {strides = array<i32>} : memref<1x256x8xf32, #tpu.memory_space<vmem>>, vector<1x256x8xf32>,
    return
  }
  func.func @transform_0(%arg0: i32, %arg1: i32) -> (i32, i32) {
    %c0_i32 = arith.constant 0 : i32
    %c0_i32_0 = arith.constant 0 : i32
    %c0_i32_1 = arith.constant 0 : i32
    return %c0_i32, %c0_i32_0 : i32, i32
  }
  func.func @transform_1(%arg0: i32, %arg1: i32) -> (i32, i32) {
    %c0_i32 = arith.constant 0 : i32
    %c0_i32_0 = arith.constant 0 : i32
    %c0_i32_1 = arith.constant 0 : i32
    return %c0_i32, %c0_i32_0 : i32, i32
  }
  func.func @transform_2(%arg0: i32, %arg1: i32) -> (i32, i32, i32) {
    %c0_i32 = arith.constant 0 : i32
    %c0_i32_0 = arith.constant 0 : i32
    return %arg0, %c0_i32, %arg1 : i32, i32, i32
  }
  func.func @transform_3(%arg0: i32, %arg1: i32) -> (i32, i32, i32) {
    %c0_i32 = arith.constant 0 : i32
    %c0_i32_0 = arith.constant 0 : i32
    return %arg0, %arg1, %c0_i32 : i32, i32, i32
  }
}

</mosaic_0001>

<llo_original>
// kernel: tpu_custom_call.1
$region0: #{tpu_custom_call.1}
  #allocation0 [shape = 'u32[]', space=smem, size = 0x4, offset = 0x4, fixed_abs, tag = 'smem constant byte address 0x4 - core index']
  #allocation1 [shape = 'u32[144,128]{1,0:T(1,128)}', space=vmem, size = 0x12000, scoped, tag = 'internal scratch']
  %s0 = inlined_call_operand.vmem [shape: f32[16,8], index: 0, kind: input, shape index: {}]
  %s1 = inlined_call_operand.vmem [shape: f32[1,8], index: 1, kind: input, shape index: {}]
  %s2 = inlined_call_operand.hbm [shape: f32[2,16,256], index: 2, kind: input, shape index: {}]
  %s3 = inlined_call_operand.vmem [shape: f32[2,256,8], index: 3, kind: output, shape index: {}]
  %s4 = sld [smem:[#allocation0]]
  $region49: #{tpu_custom_call.1} parent=0
    _
  %s6 = ssub.s32 1, %s4
  %s7 = scalar_select 0, %s6, %s4
  $region1: #{tpu_custom_call.1} parent=0
    #allocation2 [shape = 'u8[32768]{0}', space=vmem, size = 0x8000, scoped, tag = 'input window, operand 2']
    #allocation3 [shape = 's32[2]{0}', space=sflag, size = 0x8, scoped, tag = 'scoped memory for tpu_custom_call.1']
    %8 = vsyncpa [#allocation3], 0
    %s9 = scalar_lea.sflag [#allocation3], 1
    %10 = vsyncpa %s9, 0
    loop: start=0, step=1, limit=4
    $region2: #{tpu_custom_call.1} parent=1 // loop_pre_header
      _
    $region3: #{tpu_custom_call.1} parent=1 // loop_header
      %s12 = sphi 0, %s16
      %p13 = scmp.ge.s32.totalorder %s12, 4
      %s19 = sphi 0, %s31
      %s20 = sphi 0, %s27
      %s21 = sphi 0, %s19
      %s22 = sphi 0, %s20
      %s23 = sphi 0, %s21
      %s24 = sphi 0, %s22
      %s32 = sphi 0, %s32
      %s34 = sphi 0, %s32
      %s35 = sphi 0, %s34
      %s49 = sphi 0, %s35
      %s53 = sphi 0, %s53
      %s55 = sphi 0, %s53
      %s56 = sphi 0, %s55
      %s70 = sphi 0, %s56
      %s78 = sphi 0, %s80
      %s81 = sphi 0, %s78
      %s82 = sphi 0, %s81
      %s98 = sphi 0, %s82
      %s106 = sphi 0, %s108
      %s109 = sphi 0, %s106
      %s110 = sphi 0, %s109
      %s126 = sphi 0, %s110
    $region4: #{tpu_custom_call.1} parent=1 // loop_header_branch
      %15 = sbr.rel (%p13) target = $region8
    $region5: #{tpu_custom_call.1} parent=1 // loop_body
      %s17 = ssub.s32 %s12, 1
      %s18 = ssub.s32 %s12, 2
      %s25 = sadd.s32 1, %s20
      %p26 = scmp.ge.s32.totalorder %s25, 1
      %s27 = scalar_select %p26, 0, %s25
      %s28 = sadd.s32 1, %s19
      %s29 = scalar_select %p26, %s28, %s19
      %p30 = scmp.ge.s32.totalorder %s29, 2
      %s31 = scalar_select %p30, 0, %s29
      %s33 = sadd.s32 %s32, 1
      %p36 = scmp.eq.s32.totalorder %s12, 1
      %p37 = scmp.ne.s32.totalorder %s32, %s34
      %p38 = scmp.eq.s32.totalorder %s12, 0
      %p39 = por %p37, %p38
      %p40 = scmp.ne.s32.totalorder %s32, %s34
      %p41 = scmp.eq.s32.totalorder %s17, 1
      %p42 = por %p40, %p41
      %p43 = scmp.ne.s32.totalorder %s34, %s35
      %p44 = scmp.eq.s32.totalorder %s17, 0
      %p45 = por %p43, %p44
      %p46 = scmp.ne.s32.totalorder %s34, %s35
      %p47 = scmp.eq.s32.totalorder %s18, 1
      %p48 = por %p46, %p47
      %p50 = scmp.ne.s32.totalorder %s35, %s49
      %p51 = scmp.eq.s32.totalorder %s18, 0
      %p52 = por %p50, %p51
      %s54 = sadd.s32 %s53, 1
      %p57 = scmp.eq.s32.totalorder %s12, 1
      %p58 = scmp.ne.s32.totalorder %s53, %s55
      %p59 = scmp.eq.s32.totalorder %s12, 0
      %p60 = por %p58, %p59
      %p61 = scmp.ne.s32.totalorder %s53, %s55
      %p62 = scmp.eq.s32.totalorder %s17, 1
      %p63 = por %p61, %p62
      %p64 = scmp.ne.s32.totalorder %s55, %s56
      %p65 = scmp.eq.s32.totalorder %s17, 0
      %p66 = por %p64, %p65
      %p67 = scmp.ne.s32.totalorder %s55, %s56
      %p68 = scmp.eq.s32.totalorder %s18, 1
      %p69 = por %p67, %p68
      %p71 = scmp.ne.s32.totalorder %s56, %s70
      %p72 = scmp.eq.s32.totalorder %s18, 0
      %p73 = por %p71, %p72
      %s74 = ssub.s32 %s19, %s31
      %s75 = ssub.s32 %s20, %s27
      %s76 = sor.u32 %s74, %s75
      %p77 = scmp.eq.s32.totalorder %s76, 0
      %s79 = sadd.s32 %s78, 1
      %s80 = scalar_select %p77, %s78, %s79
      %p83 = pneg %p77
      %p84 = scmp.eq.s32.totalorder %s12, 1
      %p85 = por %p83, %p84
      %p86 = scmp.ne.s32.totalorder %s78, %s81
      %p87 = scmp.eq.s32.totalorder %s12, 0
      %p88 = por %p86, %p87
      %p89 = scmp.ne.s32.totalorder %s78, %s81
      %p90 = scmp.eq.s32.totalorder %s17, 1
      %p91 = por %p89, %p90
      %p92 = scmp.ne.s32.totalorder %s81, %s82
      %p93 = scmp.eq.s32.totalorder %s17, 0
      %p94 = por %p92, %p93
      %p95 = scmp.ne.s32.totalorder %s81, %s82
      %p96 = scmp.eq.s32.totalorder %s18, 1
      %p97 = por %p95, %p96
      %p99 = scmp.ne.s32.totalorder %s82, %s98
      %p100 = scmp.eq.s32.totalorder %s18, 0
      %p101 = por %p99, %p100
      %s102 = ssub.s32 %s19, %s31
      %s103 = ssub.s32 %s20, %s27
      %s104 = sor.u32 %s102, %s103
      %p105 = scmp.eq.s32.totalorder %s104, 0
      %s107 = sadd.s32 %s106, 1
      %s108 = scalar_select %p105, %s106, %s107
      %p111 = pneg %p105
      %p112 = scmp.eq.s32.totalorder %s12, 1
      %p113 = por %p111, %p112
      %p114 = scmp.ne.s32.totalorder %s106, %s109
      %p115 = scmp.eq.s32.totalorder %s12, 0
      %p116 = por %p114, %p115
      %p117 = scmp.ne.s32.totalorder %s106, %s109
      %p118 = scmp.eq.s32.totalorder %s17, 1
      %p119 = por %p117, %p118
      %p120 = scmp.ne.s32.totalorder %s109, %s110
      %p121 = scmp.eq.s32.totalorder %s17, 0
      %p122 = por %p120, %p121
      %p123 = scmp.ne.s32.totalorder %s109, %s110
      %p124 = scmp.eq.s32.totalorder %s18, 1
      %p125 = por %p123, %p124
      %p127 = scmp.ne.s32.totalorder %s110, %s126
      %p128 = scmp.eq.s32.totalorder %s18, 0
      %p129 = por %p127, %p128
      %p130 = scmp.le.s32.totalorder 1, %s12
      %p131 = scmp.lt.s32.totalorder %s12, 3
      %p132 = pnand %p130, %p131
      %p133 = pneg %p132
      // Predicated region
      $region9: #{tpu_custom_call.1} parent=5 // pred_check
        _
      $region10: #{tpu_custom_call.1} parent=5 // pred_check_branch
        %135 = sbr.rel (%p132) target = $region12
      $region11: #{tpu_custom_call.1} parent=5 // pred_region
        %s136 = ssub.s32 %s12, 1
        // Predicated region
        $region13: #{tpu_custom_call.1} parent=11 // pred_check
          %p137 = pneg %p45
        $region14: #{tpu_custom_call.1} parent=11 // pred_check_branch
          %139 = sbr.rel (%p137) target = $region16
        $region15: #{tpu_custom_call.1} parent=11 // pred_region
          _
        $region16: #{tpu_custom_call.1} parent=11 // pred_fallthru
          _
        // Predicated region
        $region17: #{tpu_custom_call.1} parent=11 // pred_check
          %p140 = pneg %p66
        $region18: #{tpu_custom_call.1} parent=11 // pred_check_branch
          %142 = sbr.rel (%p140) target = $region20
        $region19: #{tpu_custom_call.1} parent=11 // pred_region
          _
        $region20: #{tpu_custom_call.1} parent=11 // pred_fallthru
          _
      $region12: #{tpu_custom_call.1} parent=5 // pred_fallthru
        _
      %p143 = scmp.lt.s32.totalorder %s12, 2
      // Predicated region
      $region21: #{tpu_custom_call.1} parent=5 // pred_check
        %p144 = pneg %p143
      $region22: #{tpu_custom_call.1} parent=5 // pred_check_branch
        %146 = sbr.rel (%p144) target = $region24
      $region23: #{tpu_custom_call.1} parent=5 // pred_region
        // Predicated region
        $region25: #{tpu_custom_call.1} parent=23 // pred_check
          %p147 = pneg %p88
        $region26: #{tpu_custom_call.1} parent=23 // pred_check_branch
          %149 = sbr.rel (%p147) target = $region28
        $region27: #{tpu_custom_call.1} parent=23 // pred_region
          %s150 = sand.u32 %s78, 1
          %s151 = scalar_lea.sflag [#allocation3], %s150
          %s152 = sand.u32 %s78, 1
          %s153 = smul.addr %s152, 32
          %s154 = scalar_lea.vmem [#allocation2], %s153
          %s155 = smul.u32 2, %s20
          %s157 = ssub.s32 512, 512
          %158 = vsyncadd %s151, %s157
          %s159 = smul.addr %s19, 4
          %s160 = sadd.s32 %s155, %s159
          %s161 = smul.addr %s160, 128
          %s162 = scalar_lea.hbm %s2, %s161
          %s163 = sshll.u32 %s154, 4
          %s164 = int_to_ptr.vmem [resolvable:$true] %s163
          %169 = dma.hbm_to_vmem [thread:$0]  %s162, 512, %s164, %s151, 256, 256, 16
        $region28: #{tpu_custom_call.1} parent=23 // pred_fallthru
          _
      $region24: #{tpu_custom_call.1} parent=5 // pred_fallthru
        _
      %p170 = scmp.le.s32.totalorder 1, %s12
      %p171 = scmp.lt.s32.totalorder %s12, 3
      %p172 = pnand %p170, %p171
      %p173 = pneg %p172
      // Predicated region
      $region29: #{tpu_custom_call.1} parent=5 // pred_check
        _
      $region30: #{tpu_custom_call.1} parent=5 // pred_check_branch
        %175 = sbr.rel (%p172) target = $region32
      $region31: #{tpu_custom_call.1} parent=5 // pred_region
        %s176 = ssub.s32 %s12, 1
        %s177 = sand.u32 %s81, 1
        %s178 = scalar_lea.sflag [#allocation3], %s177
        %s179 = sand.u32 %s81, 1
        %s180 = smul.addr %s179, 32
        %s181 = scalar_lea.vmem [#allocation2], %s180
        // Predicated region
        $region33: #{tpu_custom_call.1} parent=31 // pred_check
          %p182 = pneg %p94
        $region34: #{tpu_custom_call.1} parent=31 // pred_check_branch
          %184 = sbr.rel (%p182) target = $region36
        $region35: #{tpu_custom_call.1} parent=31 // pred_region
          %185 = dma.done %s178, 512
        $region36: #{tpu_custom_call.1} parent=31 // pred_fallthru
          _
        %p186 = pneg %p45
        %p187 = pneg %p42
        %p188 = pneg %p66
        %p189 = pneg %p63
        %s190 = sand.u32 %s81, 1
        %s191 = scalar_lea.sflag [#allocation3], %s190
        %s192 = sand.u32 %s81, 1
        %s193 = smul.addr %s192, 32
        %s194 = scalar_lea.vmem [#allocation2], %s193
        %p195 = pneg %p94
        %p196 = pneg %p91
        %p197 = pneg %p122
        %p198 = pneg %p119
        %s199 = smul.u32 32, %s22
        %p200 = scmp.lt.s32.totalorder %s21, 1
        %s201 = scalar_select %p200, %s21, 1
        %p202 = scmp.lt.s32.totalorder %s199, 31
        %s203 = scalar_select %p202, %s199, 31
        %s204 = smul.addr %s201, 32
        %s205 = sadd.s32 %s203, %s204
        %s206 = smul.addr %s205, 8
        %s207 = scalar_lea.vmem %s3, %s206
        %s208 = smul.u32 2, %s22
        %s209 = smul.u32 32, %s22
        %p210 = scmp.lt.s32.totalorder %s21, 1
        %s211 = scalar_select %p210, %s21, 1
        %p212 = scmp.lt.s32.totalorder %s209, 31
        %s213 = scalar_select %p212, %s209, 31
        %s214 = smul.addr %s211, 32
        %s215 = sadd.s32 %s213, %s214
        %s216 = smul.addr %s215, 8
        %s217 = scalar_lea.vmem %s3, %s216
        %s218 = smul.u32 32, %s22
        %v219 = vld [vmem:[%s181] sm:$0xff]
        %v220 = vld [vmem:[%s181 + $0x8] sm:$0xff]
        %v221 = vld [vmem:[%s181 + $0x10] sm:$0xff]
        %v222 = vld [vmem:[%s181 + $0x18] sm:$0xff]
        %v223 = vld [vmem:[%s0] sm:$0xff]
        %v224 = vld [vmem:[%s0 + $0x8] sm:$0xff]
        %v225 = vld [vmem:[%s1] sm:$0x1]
        %v227 = vlaneseq
        %v228 = vshrl.u32 %v227, 7
        %v229 = vsub.s32 0, %v228
        %v230 = vrot.slane %v225, %v229
        %232 = vxpose.xlu0.b32.start [1/16] %v219, 128
        %233 = vxpose.xlu0.b32.cont [2/16] %v221, 128
        %234 = vxpose.xlu0.b32.cont [3/16] 0.0, 128
        %235 = vxpose.xlu0.b32.cont [4/16] 0.0, 128
        %236 = vxpose.xlu0.b32.cont [5/16] 0.0, 128
        %237 = vxpose.xlu0.b32.cont [6/16] 0.0, 128
        %238 = vxpose.xlu0.b32.cont [7/16] 0.0, 128
        %239 = vxpose.xlu0.b32.cont [8/16] 0.0, 128
        %240 = vxpose.xlu0.b32.cont [9/16] 0.0, 128
        %241 = vxpose.xlu0.b32.cont [10/16] 0.0, 128
        %242 = vxpose.xlu0.b32.cont [11/16] 0.0, 128
        %243 = vxpose.xlu0.b32.cont [12/16] 0.0, 128
        %244 = vxpose.xlu0.b32.cont [13/16] 0.0, 128
        %245 = vxpose.xlu0.b32.cont [14/16] 0.0, 128
        %246 = vxpose.xlu0.b32.cont [15/16] 0.0, 128
        %247 = vxpose.xlu0.b32.end [16/16] 0.0, 128
        %v248 = vpop.trf.xlu0
        %v249 = vpop.trf.xlu0
        %v250 = vpop.trf.xlu0
        %v251 = vpop.trf.xlu0
        %v252 = vpop.trf.xlu0
        %v253 = vpop.trf.xlu0
        %v254 = vpop.trf.xlu0
        %v255 = vpop.trf.xlu0
        %v256 = vpop.trf.xlu0
        %v257 = vpop.trf.xlu0
        %v258 = vpop.trf.xlu0
        %v259 = vpop.trf.xlu0
        %v260 = vpop.trf.xlu0
        %v261 = vpop.trf.xlu0
        %v262 = vpop.trf.xlu0
        %v263 = vpop.trf.xlu0
        %264 = vxpose.xlu0.b32.start [1/16] %v220, 128
        %265 = vxpose.xlu0.b32.cont [2/16] %v222, 128
        %266 = vxpose.xlu0.b32.cont [3/16] 0.0, 128
        %267 = vxpose.xlu0.b32.cont [4/16] 0.0, 128
        %268 = vxpose.xlu0.b32.cont [5/16] 0.0, 128
        %269 = vxpose.xlu0.b32.cont [6/16] 0.0, 128
        %270 = vxpose.xlu0.b32.cont [7/16] 0.0, 128
        %271 = vxpose.xlu0.b32.cont [8/16] 0.0, 128
        %272 = vxpose.xlu0.b32.cont [9/16] 0.0, 128
        %273 = vxpose.xlu0.b32.cont [10/16] 0.0, 128
        %274 = vxpose.xlu0.b32.cont [11/16] 0.0, 128
        %275 = vxpose.xlu0.b32.cont [12/16] 0.0, 128
        %276 = vxpose.xlu0.b32.cont [13/16] 0.0, 128
        %277 = vxpose.xlu0.b32.cont [14/16] 0.0, 128
        %278 = vxpose.xlu0.b32.cont [15/16] 0.0, 128
        %279 = vxpose.xlu0.b32.end [16/16] 0.0, 128
        %v280 = vpop.trf.xlu0
        %v281 = vpop.trf.xlu0
        %v282 = vpop.trf.xlu0
        %v283 = vpop.trf.xlu0
        %v284 = vpop.trf.xlu0
        %v285 = vpop.trf.xlu0
        %v286 = vpop.trf.xlu0
        %v287 = vpop.trf.xlu0
        %v288 = vpop.trf.xlu0
        %v289 = vpop.trf.xlu0
        %v290 = vpop.trf.xlu0
        %v291 = vpop.trf.xlu0
        %v292 = vpop.trf.xlu0
        %v293 = vpop.trf.xlu0
        %v294 = vpop.trf.xlu0
        %v295 = vpop.trf.xlu0
        %vm296 = vcmask 130048
        %v298 = vsel %vm296, %v248, 0
        %v301 = vsel %vm296, %v249, 0
        %v304 = vsel %vm296, %v250, 0
        %v307 = vsel %vm296, %v251, 0
        %v310 = vsel %vm296, %v252, 0
        %v313 = vsel %vm296, %v253, 0
        %v316 = vsel %vm296, %v254, 0
        %v319 = vsel %vm296, %v255, 0
        %v322 = vsel %vm296, %v256, 0
        %v325 = vsel %vm296, %v257, 0
        %v328 = vsel %vm296, %v258, 0
        %v331 = vsel %vm296, %v259, 0
        %v334 = vsel %vm296, %v260, 0
        %v337 = vsel %vm296, %v261, 0
        %v340 = vsel %vm296, %v262, 0
        %v343 = vsel %vm296, %v263, 0
        %v346 = vsel %vm296, %v280, 0
        %v349 = vsel %vm296, %v281, 0
        %v352 = vsel %vm296, %v282, 0
        %v355 = vsel %vm296, %v283, 0
        %v358 = vsel %vm296, %v284, 0
        %v361 = vsel %vm296, %v285, 0
        %v364 = vsel %vm296, %v286, 0
        %v367 = vsel %vm296, %v287, 0
        %v370 = vsel %vm296, %v288, 0
        %v373 = vsel %vm296, %v289, 0
        %v376 = vsel %vm296, %v290, 0
        %v379 = vsel %vm296, %v291, 0
        %v382 = vsel %vm296, %v292, 0
        %v385 = vsel %vm296, %v293, 0
        %v388 = vsel %vm296, %v294, 0
        %v391 = vsel %vm296, %v295, 0
        %393 = vmatprep.subr.mxu0 0.0
        %394 = vmatpush1.msra.mxu0 %v223
        %395 = vmatprep.subr.mxu0 0.0
        %396 = vmatpush1.msra.mxu0 %v224
        %397 = vmatprep.subr.mxu0 0.0
        %398 = vmatpush1.msra.mxu0 0.0
        %399 = vmatprep.subr.mxu0 0.0
        %400 = vmatpush1.msra.mxu0 0.0
        %401 = vmatprep.subr.mxu0 0.0
        %402 = vmatpush1.msra.mxu0 0.0
        %403 = vmatprep.subr.mxu0 0.0
        %404 = vmatpush1.msra.mxu0 0.0
        %405 = vmatprep.subr.mxu0 0.0
        %406 = vmatpush1.msra.mxu0 0.0
        %407 = vmatprep.subr.mxu0 0.0
        %408 = vmatpush1.msra.mxu0 0.0
        %409 = vmatprep.subr.mxu0 0.0
        %410 = vmatpush1.msra.mxu0 0.0
        %411 = vmatprep.subr.mxu0 0.0
        %412 = vmatpush1.msra.mxu0 0.0
        %413 = vmatprep.subr.mxu0 0.0
        %414 = vmatpush1.msra.mxu0 0.0
        %415 = vmatprep.subr.mxu0 0.0
        %416 = vmatpush1.msra.mxu0 0.0
        %417 = vmatprep.subr.mxu0 0.0
        %418 = vmatpush1.msra.mxu0 0.0
        %419 = vmatprep.subr.mxu0 0.0
        %420 = vmatpush1.msra.mxu0 0.0
        %421 = vmatprep.subr.mxu0 0.0
        %422 = vmatpush1.msra.mxu0 0.0
        %423 = vmatprep.subr.mxu0 0.0
        %424 = vmatpush1.msra.mxu0 0.0
        %425 = vmatprep.subr.mxu0 0.0
        %426 = vmatpush1.msra.mxu0 0.0
        %427 = vmatprep.subr.mxu0 0.0
        %428 = vmatpush1.msra.mxu0 0.0
        %429 = vmatprep.subr.mxu0 0.0
        %430 = vmatpush1.msra.mxu0 0.0
        %431 = vmatprep.subr.mxu0 0.0
        %432 = vmatpush1.msra.mxu0 0.0
        %433 = vmatprep.subr.mxu0 0.0
        %434 = vmatpush1.msra.mxu0 0.0
        %435 = vmatprep.subr.mxu0 0.0
        %436 = vmatpush1.msra.mxu0 0.0
        %437 = vmatprep.subr.mxu0 0.0
        %438 = vmatpush1.msra.mxu0 0.0
        %439 = vmatprep.subr.mxu0 0.0
        %440 = vmatpush1.msra.mxu0 0.0
        %441 = vmatprep.subr.mxu0 0.0
        %442 = vmatpush1.msra.mxu0 0.0
        %443 = vmatprep.subr.mxu0 0.0
        %444 = vmatpush1.msra.mxu0 0.0
        %445 = vmatprep.subr.mxu0 0.0
        %446 = vmatpush1.msra.mxu0 0.0
        %447 = vmatprep.subr.mxu0 0.0
        %448 = vmatpush1.msra.mxu0 0.0
        %449 = vmatprep.subr.mxu0 0.0
        %450 = vmatpush1.msra.mxu0 0.0
        %451 = vmatprep.subr.mxu0 0.0
        %452 = vmatpush1.msra.mxu0 0.0
        %453 = vmatprep.subr.mxu0 0.0
        %454 = vmatpush1.msra.mxu0 0.0
        %455 = vmatprep.subr.mxu0 0.0
        %456 = vmatpush1.msra.mxu0 0.0
        %457 = vmatprep.mubr.f32.mxu0 0.0
        %458 = vmatmul.mubr.f32.gmra.mrb[0].mxu0 %v298
        %v459 = vpop.f32.mrb[0].mxu0
        %v460 = vadd.f32 %v230, %v459
        %v461 = vpop.f32.mrb[0].mxu0
        %462 = vmatprep.mubr.f32.mxu0 0.0
        %463 = vmatmul.mubr.f32.gmra.mrb[0].mxu0 %v301
        %v464 = vpop.f32.mrb[0].mxu0
        %v465 = vadd.f32 %v230, %v464
        %v466 = vpop.f32.mrb[0].mxu0
        %467 = vmatprep.mubr.f32.mxu0 0.0
        %468 = vmatmul.mubr.f32.gmra.mrb[0].mxu0 %v304
        %v469 = vpop.f32.mrb[0].mxu0
        %v470 = vadd.f32 %v230, %v469
        %v471 = vpop.f32.mrb[0].mxu0
        %472 = vmatprep.mubr.f32.mxu0 0.0
        %473 = vmatmul.mubr.f32.gmra.mrb[0].mxu0 %v307
        %v474 = vpop.f32.mrb[0].mxu0
        %v475 = vadd.f32 %v230, %v474
        %v476 = vpop.f32.mrb[0].mxu0
        %477 = vmatprep.mubr.f32.mxu0 0.0
        %478 = vmatmul.mubr.f32.gmra.mrb[0].mxu0 %v310
        %v479 = vpop.f32.mrb[0].mxu0
        %v480 = vadd.f32 %v230, %v479
        %v481 = vpop.f32.mrb[0].mxu0
        %482 = vmatprep.mubr.f32.mxu0 0.0
        %483 = vmatmul.mubr.f32.gmra.mrb[0].mxu0 %v313
        %v484 = vpop.f32.mrb[0].mxu0
        %v485 = vadd.f32 %v230, %v484
        %v486 = vpop.f32.mrb[0].mxu0
        %487 = vmatprep.mubr.f32.mxu0 0.0
        %488 = vmatmul.mubr.f32.gmra.mrb[0].mxu0 %v316
        %v489 = vpop.f32.mrb[0].mxu0
        %v490 = vadd.f32 %v230, %v489
        %v491 = vpop.f32.mrb[0].mxu0
        %492 = vmatprep.mubr.f32.mxu0 0.0
        %493 = vmatmul.mubr.f32.gmra.mrb[0].mxu0 %v319
        %v494 = vpop.f32.mrb[0].mxu0
        %v495 = vadd.f32 %v230, %v494
        %v496 = vpop.f32.mrb[0].mxu0
        %497 = vmatprep.mubr.f32.mxu0 0.0
        %498 = vmatmul.mubr.f32.gmra.mrb[0].mxu0 %v322
        %v499 = vpop.f32.mrb[0].mxu0
        %v500 = vadd.f32 %v230, %v499
        %v501 = vpop.f32.mrb[0].mxu0
        %502 = vmatprep.mubr.f32.mxu0 0.0
        %503 = vmatmul.mubr.f32.gmra.mrb[0].mxu0 %v325
        %v504 = vpop.f32.mrb[0].mxu0
        %v505 = vadd.f32 %v230, %v504
        %v506 = vpop.f32.mrb[0].mxu0
        %507 = vmatprep.mubr.f32.mxu0 0.0
        %508 = vmatmul.mubr.f32.gmra.mrb[0].mxu0 %v328
        %v509 = vpop.f32.mrb[0].mxu0
        %v510 = vadd.f32 %v230, %v509
        %v511 = vpop.f32.mrb[0].mxu0
        %512 = vmatprep.mubr.f32.mxu0 0.0
        %513 = vmatmul.mubr.f32.gmra.mrb[0].mxu0 %v331
        %v514 = vpop.f32.mrb[0].mxu0
        %v515 = vadd.f32 %v230, %v514
        %v516 = vpop.f32.mrb[0].mxu0
        %517 = vmatprep.mubr.f32.mxu0 0.0
        %518 = vmatmul.mubr.f32.gmra.mrb[0].mxu0 %v334
        %v519 = vpop.f32.mrb[0].mxu0
        %v520 = vadd.f32 %v230, %v519
        %v521 = vpop.f32.mrb[0].mxu0
        %522 = vmatprep.mubr.f32.mxu0 0.0
        %523 = vmatmul.mubr.f32.gmra.mrb[0].mxu0 %v337
        %v524 = vpop.f32.mrb[0].mxu0
        %v525 = vadd.f32 %v230, %v524
        %v526 = vpop.f32.mrb[0].mxu0
        %527 = vmatprep.mubr.f32.mxu0 0.0
        %528 = vmatmul.mubr.f32.gmra.mrb[0].mxu0 %v340
        %v529 = vpop.f32.mrb[0].mxu0
        %v530 = vadd.f32 %v230, %v529
        %v531 = vpop.f32.mrb[0].mxu0
        %532 = vmatprep.mubr.f32.mxu0 0.0
        %533 = vmatmul.mubr.f32.gmra.mrb[0].mxu0 %v343
        %v534 = vpop.f32.mrb[0].mxu0
        %v535 = vadd.f32 %v230, %v534
        %v536 = vpop.f32.mrb[0].mxu0
        %537 = vmatprep.mubr.f32.mxu0 0.0
        %538 = vmatmul.mubr.f32.gmra.mrb[0].mxu0 %v346
        %v539 = vpop.f32.mrb[0].mxu0
        %v540 = vadd.f32 %v230, %v539
        %v541 = vpop.f32.mrb[0].mxu0
        %542 = vmatprep.mubr.f32.mxu0 0.0
        %543 = vmatmul.mubr.f32.gmra.mrb[0].mxu0 %v349
        %v544 = vpop.f32.mrb[0].mxu0
        %v545 = vadd.f32 %v230, %v544
        %v546 = vpop.f32.mrb[0].mxu0
        %547 = vmatprep.mubr.f32.mxu0 0.0
        %548 = vmatmul.mubr.f32.gmra.mrb[0].mxu0 %v352
        %v549 = vpop.f32.mrb[0].mxu0
        %v550 = vadd.f32 %v230, %v549
        %v551 = vpop.f32.mrb[0].mxu0
        %552 = vmatprep.mubr.f32.mxu0 0.0
        %553 = vmatmul.mubr.f32.gmra.mrb[0].mxu0 %v355
        %v554 = vpop.f32.mrb[0].mxu0
        %v555 = vadd.f32 %v230, %v554
        %v556 = vpop.f32.mrb[0].mxu0
        %557 = vmatprep.mubr.f32.mxu0 0.0
        %558 = vmatmul.mubr.f32.gmra.mrb[0].mxu0 %v358
        %v559 = vpop.f32.mrb[0].mxu0
        %v560 = vadd.f32 %v230, %v559
        %v561 = vpop.f32.mrb[0].mxu0
        %562 = vmatprep.mubr.f32.mxu0 0.0
        %563 = vmatmul.mubr.f32.gmra.mrb[0].mxu0 %v361
        %v564 = vpop.f32.mrb[0].mxu0
        %v565 = vadd.f32 %v230, %v564
        %v566 = vpop.f32.mrb[0].mxu0
        %567 = vmatprep.mubr.f32.mxu0 0.0
        %568 = vmatmul.mubr.f32.gmra.mrb[0].mxu0 %v364
        %v569 = vpop.f32.mrb[0].mxu0
        %v570 = vadd.f32 %v230, %v569
        %v571 = vpop.f32.mrb[0].mxu0
        %572 = vmatprep.mubr.f32.mxu0 0.0
        %573 = vmatmul.mubr.f32.gmra.mrb[0].mxu0 %v367
        %v574 = vpop.f32.mrb[0].mxu0
        %v575 = vadd.f32 %v230, %v574
        %v576 = vpop.f32.mrb[0].mxu0
        %577 = vmatprep.mubr.f32.mxu0 0.0
        %578 = vmatmul.mubr.f32.gmra.mrb[0].mxu0 %v370
        %v579 = vpop.f32.mrb[0].mxu0
        %v580 = vadd.f32 %v230, %v579
        %v581 = vpop.f32.mrb[0].mxu0
        %582 = vmatprep.mubr.f32.mxu0 0.0
        %583 = vmatmul.mubr.f32.gmra.mrb[0].mxu0 %v373
        %v584 = vpop.f32.mrb[0].mxu0
        %v585 = vadd.f32 %v230, %v584
        %v586 = vpop.f32.mrb[0].mxu0
        %587 = vmatprep.mubr.f32.mxu0 0.0
        %588 = vmatmul.mubr.f32.gmra.mrb[0].mxu0 %v376
        %v589 = vpop.f32.mrb[0].mxu0
        %v590 = vadd.f32 %v230, %v589
        %v591 = vpop.f32.mrb[0].mxu0
        %592 = vmatprep.mubr.f32.mxu0 0.0
        %593 = vmatmul.mubr.f32.gmra.mrb[0].mxu0 %v379
        %v594 = vpop.f32.mrb[0].mxu0
        %v595 = vadd.f32 %v230, %v594
        %v596 = vpop.f32.mrb[0].mxu0
        %597 = vmatprep.mubr.f32.mxu0 0.0
        %598 = vmatmul.mubr.f32.gmra.mrb[0].mxu0 %v382
        %v599 = vpop.f32.mrb[0].mxu0
        %v600 = vadd.f32 %v230, %v599
        %v601 = vpop.f32.mrb[0].mxu0
        %602 = vmatprep.mubr.f32.mxu0 0.0
        %603 = vmatmul.mubr.f32.gmra.mrb[0].mxu0 %v385
        %v604 = vpop.f32.mrb[0].mxu0
        %v605 = vadd.f32 %v230, %v604
        %v606 = vpop.f32.mrb[0].mxu0
        %607 = vmatprep.mubr.f32.mxu0 0.0
        %608 = vmatmul.mubr.f32.gmra.mrb[0].mxu0 %v388
        %v609 = vpop.f32.mrb[0].mxu0
        %v610 = vadd.f32 %v230, %v609
        %v611 = vpop.f32.mrb[0].mxu0
        %612 = vmatprep.mubr.f32.mxu0 0.0
        %613 = vmatmul.mubr.f32.gmra.mrb[0].mxu0 %v391
        %v614 = vpop.f32.mrb[0].mxu0
        %v615 = vadd.f32 %v230, %v614
        %v616 = vpop.f32.mrb[0].mxu0
        %617 = vdwg.mxu0
        %v618 = vsub.f32 0.0, %v460
        %v619 = vsub.f32 0.0, %v465
        %v620 = vsub.f32 0.0, %v470
        %v621 = vsub.f32 0.0, %v475
        %v622 = vsub.f32 0.0, %v480
        %v623 = vsub.f32 0.0, %v485
        %v624 = vsub.f32 0.0, %v490
        %v625 = vsub.f32 0.0, %v495
        %v626 = vsub.f32 0.0, %v500
        %v627 = vsub.f32 0.0, %v505
        %v628 = vsub.f32 0.0, %v510
        %v629 = vsub.f32 0.0, %v515
        %v630 = vsub.f32 0.0, %v520
        %v631 = vsub.f32 0.0, %v525
        %v632 = vsub.f32 0.0, %v530
        %v633 = vsub.f32 0.0, %v535
        %v634 = vsub.f32 0.0, %v540
        %v635 = vsub.f32 0.0, %v545
        %v636 = vsub.f32 0.0, %v550
        %v637 = vsub.f32 0.0, %v555
        %v638 = vsub.f32 0.0, %v560
        %v639 = vsub.f32 0.0, %v565
        %v640 = vsub.f32 0.0, %v570
        %v641 = vsub.f32 0.0, %v575
        %v642 = vsub.f32 0.0, %v580
        %v643 = vsub.f32 0.0, %v585
        %v644 = vsub.f32 0.0, %v590
        %v645 = vsub.f32 0.0, %v595
        %v646 = vsub.f32 0.0, %v600
        %v647 = vsub.f32 0.0, %v605
        %v648 = vsub.f32 0.0, %v610
        %v649 = vsub.f32 0.0, %v615
        %v650 = vmul.f32 %v618, 1.442695
        %v651 = vpow.pop %v650
        %v652 = vmul.f32 %v619, 1.442695
        %v653 = vpow.pop %v652
        %v654 = vmul.f32 %v620, 1.442695
        %v655 = vpow.pop %v654
        %v656 = vmul.f32 %v621, 1.442695
        %v657 = vpow.pop %v656
        %v658 = vmul.f32 %v622, 1.442695
        %v659 = vpow.pop %v658
        %v660 = vmul.f32 %v623, 1.442695
        %v661 = vpow.pop %v660
        %v662 = vmul.f32 %v624, 1.442695
        %v663 = vpow.pop %v662
        %v664 = vmul.f32 %v625, 1.442695
        %v665 = vpow.pop %v664
        %v666 = vmul.f32 %v626, 1.442695
        %v667 = vpow.pop %v666
        %v668 = vmul.f32 %v627, 1.442695
        %v669 = vpow.pop %v668
        %v670 = vmul.f32 %v628, 1.442695
        %v671 = vpow.pop %v670
        %v672 = vmul.f32 %v629, 1.442695
        %v673 = vpow.pop %v672
        %v674 = vmul.f32 %v630, 1.442695
        %v675 = vpow.pop %v674
        %v676 = vmul.f32 %v631, 1.442695
        %v677 = vpow.pop %v676
        %v678 = vmul.f32 %v632, 1.442695
        %v679 = vpow.pop %v678
        %v680 = vmul.f32 %v633, 1.442695
        %v681 = vpow.pop %v680
        %v682 = vmul.f32 %v634, 1.442695
        %v683 = vpow.pop %v682
        %v684 = vmul.f32 %v635, 1.442695
        %v685 = vpow.pop %v684
        %v686 = vmul.f32 %v636, 1.442695
        %v687 = vpow.pop %v686
        %v688 = vmul.f32 %v637, 1.442695
        %v689 = vpow.pop %v688
        %v690 = vmul.f32 %v638, 1.442695
        %v691 = vpow.pop %v690
        %v692 = vmul.f32 %v639, 1.442695
        %v693 = vpow.pop %v692
        %v694 = vmul.f32 %v640, 1.442695
        %v695 = vpow.pop %v694
        %v696 = vmul.f32 %v641, 1.442695
        %v697 = vpow.pop %v696
        %v698 = vmul.f32 %v642, 1.442695
        %v699 = vpow.pop %v698
        %v700 = vmul.f32 %v643, 1.442695
        %v701 = vpow.pop %v700
        %v702 = vmul.f32 %v644, 1.442695
        %v703 = vpow.pop %v702
        %v704 = vmul.f32 %v645, 1.442695
        %v705 = vpow.pop %v704
        %v706 = vmul.f32 %v646, 1.442695
        %v707 = vpow.pop %v706
        %v708 = vmul.f32 %v647, 1.442695
        %v709 = vpow.pop %v708
        %v710 = vmul.f32 %v648, 1.442695
        %v711 = vpow.pop %v710
        %v712 = vmul.f32 %v649, 1.442695
        %v713 = vpow.pop %v712
        %v714 = vadd.f32 %v651, 1.0
        %v715 = vadd.f32 %v653, 1.0
        %v716 = vadd.f32 %v655, 1.0
        %v717 = vadd.f32 %v657, 1.0
        %v718 = vadd.f32 %v659, 1.0
        %v719 = vadd.f32 %v661, 1.0
        %v720 = vadd.f32 %v663, 1.0
        %v721 = vadd.f32 %v665, 1.0
        %v722 = vadd.f32 %v667, 1.0
        %v723 = vadd.f32 %v669, 1.0
        %v724 = vadd.f32 %v671, 1.0
        %v725 = vadd.f32 %v673, 1.0
        %v726 = vadd.f32 %v675, 1.0
        %v727 = vadd.f32 %v677, 1.0
        %v728 = vadd.f32 %v679, 1.0
        %v729 = vadd.f32 %v681, 1.0
        %v730 = vadd.f32 %v683, 1.0
        %v731 = vadd.f32 %v685, 1.0
        %v732 = vadd.f32 %v687, 1.0
        %v733 = vadd.f32 %v689, 1.0
        %v734 = vadd.f32 %v691, 1.0
        %v735 = vadd.f32 %v693, 1.0
        %v736 = vadd.f32 %v695, 1.0
        %v737 = vadd.f32 %v697, 1.0
        %v738 = vadd.f32 %v699, 1.0
        %v739 = vadd.f32 %v701, 1.0
        %v740 = vadd.f32 %v703, 1.0
        %v741 = vadd.f32 %v705, 1.0
        %v742 = vadd.f32 %v707, 1.0
        %v743 = vadd.f32 %v709, 1.0
        %v744 = vadd.f32 %v711, 1.0
        %v745 = vadd.f32 %v713, 1.0
        %v746 = vrcp.pop %v714
        %v747 = vrcp.pop %v715
        %v748 = vrcp.pop %v716
        %v749 = vrcp.pop %v717
        %v750 = vrcp.pop %v718
        %v751 = vrcp.pop %v719
        %v752 = vrcp.pop %v720
        %v753 = vrcp.pop %v721
        %v754 = vrcp.pop %v722
        %v755 = vrcp.pop %v723
        %v756 = vrcp.pop %v724
        %v757 = vrcp.pop %v725
        %v758 = vrcp.pop %v726
        %v759 = vrcp.pop %v727
        %v760 = vrcp.pop %v728
        %v761 = vrcp.pop %v729
        %v762 = vrcp.pop %v730
        %v763 = vrcp.pop %v731
        %v764 = vrcp.pop %v732
        %v765 = vrcp.pop %v733
        %v766 = vrcp.pop %v734
        %v767 = vrcp.pop %v735
        %v768 = vrcp.pop %v736
        %v769 = vrcp.pop %v737
        %v770 = vrcp.pop %v738
        %v771 = vrcp.pop %v739
        %v772 = vrcp.pop %v740
        %v773 = vrcp.pop %v741
        %v774 = vrcp.pop %v742
        %v775 = vrcp.pop %v743
        %v776 = vrcp.pop %v744
        %v777 = vrcp.pop %v745
        %v778 = vmul.f32 %v460, %v746
        %v779 = vmul.f32 %v465, %v747
        %v780 = vmul.f32 %v470, %v748
        %v781 = vmul.f32 %v475, %v749
        %v782 = vmul.f32 %v480, %v750
        %v783 = vmul.f32 %v485, %v751
        %v784 = vmul.f32 %v490, %v752
        %v785 = vmul.f32 %v495, %v753
        %v786 = vmul.f32 %v500, %v754
        %v787 = vmul.f32 %v505, %v755
        %v788 = vmul.f32 %v510, %v756
        %v789 = vmul.f32 %v515, %v757
        %v790 = vmul.f32 %v520, %v758
        %v791 = vmul.f32 %v525, %v759
        %v792 = vmul.f32 %v530, %v760
        %v793 = vmul.f32 %v535, %v761
        %v794 = vmul.f32 %v540, %v762
        %v795 = vmul.f32 %v545, %v763
        %v796 = vmul.f32 %v550, %v764
        %v797 = vmul.f32 %v555, %v765
        %v798 = vmul.f32 %v560, %v766
        %v799 = vmul.f32 %v565, %v767
        %v800 = vmul.f32 %v570, %v768
        %v801 = vmul.f32 %v575, %v769
        %v802 = vmul.f32 %v580, %v770
        %v803 = vmul.f32 %v585, %v771
        %v804 = vmul.f32 %v590, %v772
        %v805 = vmul.f32 %v595, %v773
        %v806 = vmul.f32 %v600, %v774
        %v807 = vmul.f32 %v605, %v775
        %v808 = vmul.f32 %v610, %v776
        %v809 = vmul.f32 %v615, %v777
        %vm810 = vcmask 64512
        %811 = vst.msk [vmem:[%s217] sm:$0xff] %vm810, %v778
        %812 = vst.msk [vmem:[%s217 + $0x8] sm:$0xff] %vm810, %v779
        %813 = vst.msk [vmem:[%s217 + $0x10] sm:$0xff] %vm810, %v780
        %814 = vst.msk [vmem:[%s217 + $0x18] sm:$0xff] %vm810, %v781
        %815 = vst.msk [vmem:[%s217 + $0x20] sm:$0xff] %vm810, %v782
        %816 = vst.msk [vmem:[%s217 + $0x28] sm:$0xff] %vm810, %v783
        %817 = vst.msk [vmem:[%s217 + $0x30] sm:$0xff] %vm810, %v784
        %818 = vst.msk [vmem:[%s217 + $0x38] sm:$0xff] %vm810, %v785
        %819 = vst.msk [vmem:[%s217 + $0x40] sm:$0xff] %vm810, %v786
        %820 = vst.msk [vmem:[%s217 + $0x48] sm:$0xff] %vm810, %v787
        %821 = vst.msk [vmem:[%s217 + $0x50] sm:$0xff] %vm810, %v788
        %822 = vst.msk [vmem:[%s217 + $0x58] sm:$0xff] %vm810, %v789
        %823 = vst.msk [vmem:[%s217 + $0x60] sm:$0xff] %vm810, %v790
        %824 = vst.msk [vmem:[%s217 + $0x68] sm:$0xff] %vm810, %v791
        %825 = vst.msk [vmem:[%s217 + $0x70] sm:$0xff] %vm810, %v792
        %826 = vst.msk [vmem:[%s217 + $0x78] sm:$0xff] %vm810, %v793
        %827 = vst.msk [vmem:[%s217 + $0x80] sm:$0xff] %vm810, %v794
        %828 = vst.msk [vmem:[%s217 + $0x88] sm:$0xff] %vm810, %v795
        %829 = vst.msk [vmem:[%s217 + $0x90] sm:$0xff] %vm810, %v796
        %830 = vst.msk [vmem:[%s217 + $0x98] sm:$0xff] %vm810, %v797
        %831 = vst.msk [vmem:[%s217 + $0xa0] sm:$0xff] %vm810, %v798
        %832 = vst.msk [vmem:[%s217 + $0xa8] sm:$0xff] %vm810, %v799
        %833 = vst.msk [vmem:[%s217 + $0xb0] sm:$0xff] %vm810, %v800
        %834 = vst.msk [vmem:[%s217 + $0xb8] sm:$0xff] %vm810, %v801
        %835 = vst.msk [vmem:[%s217 + $0xc0] sm:$0xff] %vm810, %v802
        %836 = vst.msk [vmem:[%s217 + $0xc8] sm:$0xff] %vm810, %v803
        %837 = vst.msk [vmem:[%s217 + $0xd0] sm:$0xff] %vm810, %v804
        %838 = vst.msk [vmem:[%s217 + $0xd8] sm:$0xff] %vm810, %v805
        %839 = vst.msk [vmem:[%s217 + $0xe0] sm:$0xff] %vm810, %v806
        %840 = vst.msk [vmem:[%s217 + $0xe8] sm:$0xff] %vm810, %v807
        %841 = vst.msk [vmem:[%s217 + $0xf0] sm:$0xff] %vm810, %v808
        %842 = vst.msk [vmem:[%s217 + $0xf8] sm:$0xff] %vm810, %v809
        %s843 = smul.u32 32, %s22
        %p844 = scmp.lt.s32.totalorder %s21, 1
        %s845 = scalar_select %p844, %s21, 1
        %p846 = scmp.lt.s32.totalorder %s843, 31
        %s847 = scalar_select %p846, %s843, 31
        %s848 = smul.addr %s845, 32
        %s849 = sadd.s32 %s847, %s848
        %s850 = smul.addr %s849, 8
        %s851 = scalar_lea.vmem %s3, %s850
        // Predicated region
        $region37: #{tpu_custom_call.1} parent=31 // pred_check
          %p852 = pneg %p119
        $region38: #{tpu_custom_call.1} parent=31 // pred_check_branch
          %854 = sbr.rel (%p852) target = $region40
        $region39: #{tpu_custom_call.1} parent=31 // pred_region
          %s855 = smul.u32 32, %s22
        $region40: #{tpu_custom_call.1} parent=31 // pred_fallthru
          _
      $region32: #{tpu_custom_call.1} parent=5 // pred_fallthru
        _
      %p856 = scmp.le.s32.totalorder 2, %s12
      // Predicated region
      $region41: #{tpu_custom_call.1} parent=5 // pred_check
        %p857 = pneg %p856
      $region42: #{tpu_custom_call.1} parent=5 // pred_check_branch
        %859 = sbr.rel (%p857) target = $region44
      $region43: #{tpu_custom_call.1} parent=5 // pred_region
        %s860 = ssub.s32 %s12, 2
        // Predicated region
        $region45: #{tpu_custom_call.1} parent=43 // pred_check
          %p861 = pneg %p125
        $region46: #{tpu_custom_call.1} parent=43 // pred_check_branch
          %863 = sbr.rel (%p861) target = $region48
        $region47: #{tpu_custom_call.1} parent=43 // pred_region
          %s864 = smul.u32 32, %s24
          %p865 = scmp.lt.s32.totalorder %s23, 1
          %s866 = scalar_select %p865, %s23, 1
          %p867 = scmp.lt.s32.totalorder %s864, 31
          %s868 = scalar_select %p867, %s864, 31
          %s869 = smul.addr %s866, 32
          %s870 = sadd.s32 %s868, %s869
          %s871 = smul.addr %s870, 8
          %s872 = scalar_lea.vmem %s3, %s871
        $region48: #{tpu_custom_call.1} parent=43 // pred_fallthru
          _
      $region44: #{tpu_custom_call.1} parent=5 // pred_fallthru
        _
    $region6: #{tpu_custom_call.1} parent=1 // loop_footer
      %s16 = sadd.s32 1, %s12
    $region7: #{tpu_custom_call.1} parent=1 // loop_footer_branch
      %11 = sbr.rel target = $region3
    $region8: #{tpu_custom_call.1} parent=1 // loop_exit
      _
    %873 = vsyncpa [#allocation3], 1
    %s874 = scalar_lea.sflag [#allocation3], 1
    %875 = vsyncpa %s874, 1

</llo_original>
